<compile_context>
chip_gen: v7x
topology: tpu7x:2x2x1
jax: 0.10.0
libtpu: 0.0.40
codegen_flags: <defaults>
</compile_context>

<pallas_src>
import jax
import jax.numpy as jnp
from jax import lax
from jax.experimental import pallas as pl
from jax.experimental.pallas import tpu as pltpu

_MIB = 1024 * 1024


def _round_up(x: int, m: int) -> int:
    return ((x + m - 1) // m) * m


def _pick_tile(dim: int, align: int, max_tile: int,
               candidates=(1024, 512, 256, 128)):
    """Pick a tile <= max_tile for `dim` with minimal extra padding.

    Returns (tile, padded_dim) with padded_dim % tile == 0 and tile % align == 0.
    """
    d0 = _round_up(dim, align)
    if d0 <= max_tile:
        return d0, d0
    for t in candidates:
        if t > max_tile or t % align != 0:
            continue
        padded = _round_up(d0, t)
        if (padded - d0) * 8 <= d0:          # accept <= 12.5% padding overhead
            return t, padded
    t = 128                                   # 128 % align == 0 for align in {8, 16, 32, 128}
    return t, _round_up(d0, t)


def _vmem_capacity_bytes() -> int:
    try:
        return int(pltpu.get_tpu_info().vmem_capacity_bytes)
    except Exception:
        return 64 * _MIB                      # v7x-conservative fallback


def _matmul_relu_kernel_f32(x_ref, w_ref, o_ref):
    # x_ref: (tm, tk), w_ref: (tn, tk), o_ref: (tm, tn) f32 — used directly as accumulator.
    k = pl.program_id(2)

    @pl.when(k == 0)
    def _():
        o_ref[...] = jnp.zeros_like(o_ref)

    # y_tile += x_tile @ w_tile.T  (contraction on dim 1 of both; MXU-native, no transpose)
    o_ref[...] += lax.dot_general(
        x_ref[...], w_ref[...],
        dimension_numbers=(((1,), (1,)), ((), ())),
        preferred_element_type=jnp.float32,
    )

    @pl.when(k == pl.num_programs(2) - 1)
    def _():
        o_ref[...] = jnp.maximum(o_ref[...], 0.0)


def _matmul_relu_kernel_acc(x_ref, w_ref, o_ref, acc_ref):
    # Used only when the output dtype is not f32 (keep an f32 VMEM accumulator).
    k = pl.program_id(2)

    @pl.when(k == 0)
    def _():
        acc_ref[...] = jnp.zeros_like(acc_ref)

    acc_ref[...] += lax.dot_general(
        x_ref[...], w_ref[...],
        dimension_numbers=(((1,), (1,)), ((), ())),
        preferred_element_type=jnp.float32,
    )

    @pl.when(k == pl.num_programs(2) - 1)
    def _():
        o_ref[...] = jnp.maximum(acc_ref[...], 0.0).astype(o_ref.dtype)


def moe_temporal_block(hidden_state: jax.Array, weight: jax.Array, *,
                       use_pallas: bool | None = None,
                       compute_dtype=None) -> jax.Array:
    """relu(hidden_state @ weight.T). hidden_state: (..., H); weight: (C, H)."""
    *lead, H = hidden_state.shape
    C, Hw = weight.shape
    assert Hw == H, "weight must be (out_channels, hidden_size)"

    out_dtype = jnp.result_type(hidden_state.dtype, weight.dtype)

    x2d = hidden_state.reshape(-1, H)
    M = x2d.shape[0]

    # Tiny problems: a single fused XLA op beats any pallas_call overhead.
    if use_pallas is None:
        use_pallas = (M * C * H) >= (64 * 64 * 64)
    if not use_pallas:
        return jnp.maximum(x2d @ weight.T, 0.0).astype(out_dtype).reshape(*lead, C)

    if compute_dtype is not None:            # optional bf16-operand path (f32 accumulation)
        x2d = x2d.astype(compute_dtype)
        weight = weight.astype(compute_dtype)

    x_item = jnp.dtype(x2d.dtype).itemsize
    w_item = jnp.dtype(weight.dtype).itemsize
    o_item = jnp.dtype(out_dtype).itemsize
    use_acc = out_dtype != jnp.float32       # f32 outputs accumulate straight into o_ref

    sub = max(8, 32 // min(x_item, o_item))  # sublane multiple: 8 (f32), 16 (bf16), 32 (int8)

    # ---- VMEM budget (per generation) and tile caps -------------------------------------
    vmem_cap = _vmem_capacity_bytes()        # 128 MiB (v5e/v6e), 64 MiB (v7x)
    usable = int(vmem_cap * 0.85)            # leave headroom for compiler-internal scratch
    max_tm, max_tn = 1024, 1024
    out_bytes = 2 * max_tm * max_tn * o_item + (max_tm * max_tn * 4 if use_acc else 0)
    per_k_bytes = 2 * (max_tm * x_item + max_tn * w_item)    # double-buffered input columns
    max_tk = max(128, min(2048, ((usable - 8 * _MIB - out_bytes) // per_k_bytes) // 128 * 128))

    # ---- tile / padding selection (minimal padding, lane/MXU aligned) --------------------
    tm, M_pad = _pick_tile(M, sub, max_tm, candidates=(1024, 512, 256, 128))
    tn, C_pad = _pick_tile(C, 128, max_tn, candidates=(1024, 512, 256, 128))
    tk, H_pad = _pick_tile(H, 128, max_tk, candidates=(2048, 1024, 512, 256, 128))

    # v7x megacore: on non-trivial problems make sure the parallel axes have >= 2 blocks.
    if M_pad == tm and C_pad == tn and tm * tn >= 512 * 256:
        if tn % 256 == 0:
            tn //= 2
        elif tm % (2 * sub) == 0:
            tm //= 2

    # Zero-padding keeps the math exact (padded rows/cols contribute nothing; sliced off below).
    x_p = x2d if (M_pad, H_pad) == (M, H) else jnp.pad(x2d, ((0, M_pad - M), (0, H_pad - H)))
    w_p = weight if (C_pad, H_pad) == (C, H) else jnp.pad(weight, ((0, C_pad - C), (0, H_pad - H)))

    gm, gn, gk = M_pad // tm, C_pad // tn, H_pad // tk

    # Put the larger operand on the OUTER grid axis: when gk == 1 its blocks stay resident
    # across the inner sweep and are read from HBM exactly once.
    m_outer = (M_pad * x_item) >= (C_pad * w_item)
    if m_outer:
        grid = (gm, gn, gk)
        x_spec = pl.BlockSpec((tm, tk), lambda i, j, k: (i, k))
        w_spec = pl.BlockSpec((tn, tk), lambda i, j, k: (j, k))
        o_spec = pl.BlockSpec((tm, tn), lambda i, j, k: (i, j))
    else:
        grid = (gn, gm, gk)
        x_spec = pl.BlockSpec((tm, tk), lambda j, i, k: (i, k))
        w_spec = pl.BlockSpec((tn, tk), lambda j, i, k: (j, k))
        o_spec = pl.BlockSpec((tm, tn), lambda j, i, k: (i, j))

    # ---- real VMEM footprint of the chosen tiles -> scoped limit -------------------------
    footprint = (2 * tm * tk * x_item        # double-buffered x tile
                 + 2 * tn * tk * w_item      # double-buffered w tile
                 + 2 * tm * tn * o_item)     # double-buffered output tile
    if use_acc:
        footprint += tm * tn * 4
    vmem_limit = int(min(usable, max(32 * _MIB, footprint + 8 * _MIB)))

    kernel = _matmul_relu_kernel_acc if use_acc else _matmul_relu_kernel_f32
    scratch = [pltpu.VMEM((tm, tn), jnp.float32)] if use_acc else []

    out = pl.pallas_call(
        kernel,
        out_shape=jax.ShapeDtypeStruct((M_pad, C_pad), out_dtype),
        grid_spec=pltpu.PrefetchScalarGridSpec(
            num_scalar_prefetch=0,
            grid=grid,
            in_specs=[x_spec, w_spec],
            out_specs=o_spec,
            scratch_shapes=scratch,
        ),
        compiler_params=pltpu.CompilerParams(
            dimension_semantics=("parallel", "parallel", "arbitrary"),
            vmem_limit_bytes=vmem_limit,
        ),
    )(x_p, w_p)

    return out[:M, :C].reshape(*lead, C)


def glorot_uniform(key, out_features, in_features, dtype=jnp.float32):
    # Matches torch_geometric 'glorot' initializer: U(-a, a), a = sqrt(6/(fan_in+fan_out))
    limit = jnp.sqrt(6.0 / (in_features + out_features))
    return jax.random.uniform(
        key, (out_features, in_features), dtype=dtype, minval=-limit, maxval=limit
    )


if __name__ == "__main__":
    hidden_size = 32
    intermediate_size = 64  # unused by the forward pass; kept for module-shape parity
    out_channels = 16
    batch, seq = 2, 8

    key = jax.random.PRNGKey(0)
    k_x, k_w = jax.random.split(key)

    hidden_state = jax.random.normal(k_x, (batch, seq, hidden_size), dtype=jnp.float32)
    weight = glorot_uniform(k_w, out_channels, hidden_size)

    # Force the Pallas path (the auto heuristic would route a shape this tiny to plain XLA).
    out = moe_temporal_block(hidden_state, weight, use_pallas=True)
    out = jax.block_until_ready(out)

    # cross-check against plain-JAX reference
    ref = jnp.maximum(hidden_state @ weight.T, 0.0)
    assert out.shape == (batch, seq, out_channels)
    assert jnp.allclose(out, ref, atol=1e-5, rtol=1e-5)

    print("KERNEL_OK")
</pallas_src>

<mosaic_0001>
module attributes {stable_mosaic.version = 11 : i64} {
  func.func @_matmul_relu_kernel_f32(%arg0: i32, %arg1: i32, %arg2: i32, %arg3: memref<16x128xf32, #tpu.memory_space<vmem>>, %arg4: memref<128x128xf32, #tpu.memory_space<vmem>>, %arg5: memref<16x128xf32, #tpu.memory_space<vmem>>) attributes {dimension_semantics = [#tpu.dimension_semantics<parallel>, #tpu.dimension_semantics<parallel>, #tpu.dimension_semantics<arbitrary>], iteration_bounds = array<i64: 1, 1, 1>, scalar_prefetch = 0 : i64, scratch_operands = 0 : i64, tpu.core_type = #tpu.core_type<tc>, window_params = [{transform_indices = @transform_0, window_bounds = array<i64: 16, 128>}, {transform_indices = @transform_1, window_bounds = array<i64: 128, 128>}, {transform_indices = @transform_2, window_bounds = array<i64: 16, 128>}]} {
    %c0_i32 = arith.constant 0 : i32
    %0 = arith.cmpi eq, %arg2, %c0_i32 : i32
    %1 = arith.extui %0 : i1 to i32
    %c0_i32_0 = arith.constant 0 : i32
    %2 = arith.cmpi ne, %1, %c0_i32_0 : i32
    scf.if %2 {
      %cst_10 = arith.constant 0.000000e+00 : f32
      %12 = vector.broadcast %cst_10 : f32 to vector<16x128xf32>
      %c0_11 = arith.constant 0 : index
      %c0_12 = arith.constant 0 : index
      %13 = vector.load %arg5[%c0_11, %c0_12] : memref<16x128xf32, #tpu.memory_space<vmem>>, vector<16x128xf32>
      tpu.vector_store %arg5[%c0_11, %c0_12], %12 {strides = array<i32>} : memref<16x128xf32, #tpu.memory_space<vmem>>, vector<16x128xf32>,
    } else {
    }
    %c0 = arith.constant 0 : index
    %c0_1 = arith.constant 0 : index
    %3 = vector.load %arg5[%c0, %c0_1] : memref<16x128xf32, #tpu.memory_space<vmem>>, vector<16x128xf32>
    %c0_2 = arith.constant 0 : index
    %c0_3 = arith.constant 0 : index
    %4 = vector.load %arg3[%c0_2, %c0_3] : memref<16x128xf32, #tpu.memory_space<vmem>>, vector<16x128xf32>
    %c0_4 = arith.constant 0 : index
    %c0_5 = arith.constant 0 : index
    %5 = vector.load %arg4[%c0_4, %c0_5] : memref<128x128xf32, #tpu.memory_space<vmem>>, vector<128x128xf32>
    %cst = arith.constant dense<0.000000e+00> : vector<16x128xf32>
    %6 = tpu.matmul %4, %5, %cst {dimension_numbers = #tpu.dot_dimension_numbers<[1], [1], [0], [0], [0, 0, 1, 0], [], []>} : vector<16x128xf32>, vector<128x128xf32>, vector<16x128xf32> -> vector<16x128xf32>
    %7 = arith.addf %3, %6 : vector<16x128xf32>
    %c0_6 = arith.constant 0 : index
    %c0_7 = arith.constant 0 : index
    %8 = vector.load %arg5[%c0_6, %c0_7] : memref<16x128xf32, #tpu.memory_space<vmem>>, vector<16x128xf32>
    tpu.vector_store %arg5[%c0_6, %c0_7], %7 {strides = array<i32>} : memref<16x128xf32, #tpu.memory_space<vmem>>, vector<16x128xf32>,
    %c0_i32_8 = arith.constant 0 : i32
    %9 = arith.cmpi eq, %arg2, %c0_i32_8 : i32
    %10 = arith.extui %9 : i1 to i32
    %c0_i32_9 = arith.constant 0 : i32
    %11 = arith.cmpi ne, %10, %c0_i32_9 : i32
    scf.if %11 {
      %c0_10 = arith.constant 0 : index
      %c0_11 = arith.constant 0 : index
      %12 = vector.load %arg5[%c0_10, %c0_11] : memref<16x128xf32, #tpu.memory_space<vmem>>, vector<16x128xf32>
      %cst_12 = arith.constant 0.000000e+00 : f32
      %13 = vector.broadcast %cst_12 : f32 to vector<16x128xf32>
      %14 = arith.maximumf %12, %13 : vector<16x128xf32>
      %c0_13 = arith.constant 0 : index
      %c0_14 = arith.constant 0 : index
      %15 = vector.load %arg5[%c0_13, %c0_14] : memref<16x128xf32, #tpu.memory_space<vmem>>, vector<16x128xf32>
      tpu.vector_store %arg5[%c0_13, %c0_14], %14 {strides = array<i32>} : memref<16x128xf32, #tpu.memory_space<vmem>>, vector<16x128xf32>,
    } else {
    }
    return
  }
  func.func @transform_0(%arg0: i32, %arg1: i32, %arg2: i32) -> (i32, i32) {
    %c0_i32 = arith.constant 0 : i32
    return %arg1, %arg2 : i32, i32
  }
  func.func @transform_1(%arg0: i32, %arg1: i32, %arg2: i32) -> (i32, i32) {
    %c0_i32 = arith.constant 0 : i32
    return %arg0, %arg2 : i32, i32
  }
  func.func @transform_2(%arg0: i32, %arg1: i32, %arg2: i32) -> (i32, i32) {
    %c0_i32 = arith.constant 0 : i32
    return %arg1, %arg0 : i32, i32
  }
}

</mosaic_0001>

<llo_original>
// kernel: tpu_custom_call.1
$region0: #{tpu_custom_call.1}
  #allocation0 [shape = 'u32[]', space=smem, size = 0x4, offset = 0x4, fixed_abs, tag = 'smem constant byte address 0x4 - core index']
  #allocation1 [shape = 'u32[144,128]{1,0:T(1,128)}', space=vmem, size = 0x12000, scoped, tag = 'internal scratch']
  %s0 = inlined_call_operand.hbm [shape: f32[16,128], index: 0, kind: input, shape index: {}]
  %s1 = inlined_call_operand.hbm [shape: f32[128,128], index: 1, kind: input, shape index: {}]
  %s2 = inlined_call_operand.hbm [shape: f32[16,128], index: 2, kind: output, shape index: {}]
  %s3 = sld [smem:[#allocation0]]
  $region34: #{tpu_custom_call.1} parent=0
    _
  %s5 = ssub.s32 1, %s3
  %s6 = scalar_select 0, %s5, %s3
  $region1: #{tpu_custom_call.1} parent=0
    #allocation2 [shape = 'u8[8192]{0}', space=vmem, size = 0x2000, scoped, tag = 'input window, operand 0, single buffered']
    #allocation3 [shape = 's32[1]{0}', space=sflag, size = 0x4, scoped, tag = 'scoped memory for tpu_custom_call.1']
    #allocation4 [shape = 's32[1]{0}', space=sflag, size = 0x4, scoped, tag = 'scoped memory for tpu_custom_call.1']
    #allocation5 [shape = 'u8[65536]{0}', space=vmem, size = 0x10000, scoped, tag = 'input window, operand 1, single buffered']
    #allocation6 [shape = 's32[1]{0}', space=sflag, size = 0x4, scoped, tag = 'scoped memory for tpu_custom_call.1']
    #allocation7 [shape = 'u8[8192]{0}', space=vmem, size = 0x2000, scoped, tag = 'output window, operand 0, single buffered']
    %7 = vsyncpa [#allocation3], 0
    %8 = vsyncpa [#allocation6], 0
    %9 = vsyncpa [#allocation4], 0
    // Predicated region
    $region2: #{tpu_custom_call.1} parent=1 // pred_check
      _
    $region3: #{tpu_custom_call.1} parent=1 // pred_check_branch
      %11 = sbr.rel (0) target = $region5
    $region4: #{tpu_custom_call.1} parent=1 // pred_region
      %s13 = ssub.s32 256, 256
      %14 = vsyncadd [#allocation3], %s13
      %s15 = sshll.u32 [#allocation2], 4
      %s16 = int_to_ptr.vmem [resolvable:$true] %s15
      %21 = dma.hbm_to_vmem [thread:$0]  %s0, 256, %s16, [#allocation3], 128, 128, 8
    $region5: #{tpu_custom_call.1} parent=1 // pred_fallthru
      _
    // Predicated region
    $region6: #{tpu_custom_call.1} parent=1 // pred_check
      _
    $region7: #{tpu_custom_call.1} parent=1 // pred_check_branch
      %23 = sbr.rel (0) target = $region9
    $region8: #{tpu_custom_call.1} parent=1 // pred_region
      %s25 = ssub.s32 2048, 2048
      %26 = vsyncadd [#allocation6], %s25
      %s27 = sshll.u32 [#allocation5], 4
      %s28 = int_to_ptr.vmem [resolvable:$true] %s27
      %33 = dma.hbm_to_vmem [thread:$0]  %s1, 2048, %s28, [#allocation6], 128, 128, 8
    $region9: #{tpu_custom_call.1} parent=1 // pred_fallthru
      _
    // Predicated region
    $region10: #{tpu_custom_call.1} parent=1 // pred_check
      _
    $region11: #{tpu_custom_call.1} parent=1 // pred_check_branch
      %35 = sbr.rel (0) target = $region13
    $region12: #{tpu_custom_call.1} parent=1 // pred_region
      %36 = dma.done [#allocation3], 256
    $region13: #{tpu_custom_call.1} parent=1 // pred_fallthru
      _
    // Predicated region
    $region14: #{tpu_custom_call.1} parent=1 // pred_check
      _
    $region15: #{tpu_custom_call.1} parent=1 // pred_check_branch
      %38 = sbr.rel (0) target = $region17
    $region16: #{tpu_custom_call.1} parent=1 // pred_region
      %39 = dma.done [#allocation6], 2048
    $region17: #{tpu_custom_call.1} parent=1 // pred_fallthru
      _
    %p40 = scmp.eq.s32.totalorder 0, 0
    // Predicated region
    $region18: #{tpu_custom_call.1} parent=1 // pred_check
      %p41 = pneg %p40
    $region19: #{tpu_custom_call.1} parent=1 // pred_check_branch
      %43 = sbr.rel (%p41) target = $region21
    $region20: #{tpu_custom_call.1} parent=1 // pred_region
      %44 = vst [vmem:[#allocation7] sm:$0xff] 0.0
      %45 = vst [vmem:[#allocation7 + $0x8] sm:$0xff] 0.0
    $region21: #{tpu_custom_call.1} parent=1 // pred_fallthru
      _
    %v46 = vld [vmem:[#allocation7] sm:$0xff]
    %v47 = vld [vmem:[#allocation7 + $0x8] sm:$0xff]
    %v48 = vld [vmem:[#allocation2] sm:$0xff]
    %v49 = vld [vmem:[#allocation2 + $0x8] sm:$0xff]
    %v50 = vld [vmem:[#allocation5] sm:$0xff]
    %v51 = vld [vmem:[#allocation5 + $0x8] sm:$0xff]
    %v52 = vld [vmem:[#allocation5 + $0x10] sm:$0xff]
    %v53 = vld [vmem:[#allocation5 + $0x18] sm:$0xff]
    %v54 = vld [vmem:[#allocation5 + $0x20] sm:$0xff]
    %v55 = vld [vmem:[#allocation5 + $0x28] sm:$0xff]
    %v56 = vld [vmem:[#allocation5 + $0x30] sm:$0xff]
    %v57 = vld [vmem:[#allocation5 + $0x38] sm:$0xff]
    %v58 = vld [vmem:[#allocation5 + $0x40] sm:$0xff]
    %v59 = vld [vmem:[#allocation5 + $0x48] sm:$0xff]
    %v60 = vld [vmem:[#allocation5 + $0x50] sm:$0xff]
    %v61 = vld [vmem:[#allocation5 + $0x58] sm:$0xff]
    %v62 = vld [vmem:[#allocation5 + $0x60] sm:$0xff]
    %v63 = vld [vmem:[#allocation5 + $0x68] sm:$0xff]
    %v64 = vld [vmem:[#allocation5 + $0x70] sm:$0xff]
    %v65 = vld [vmem:[#allocation5 + $0x78] sm:$0xff]
    %66 = vmatprep.subr.mxu0 0.0
    %67 = vmatpush1.xpose.msra.mxu0 %v50
    %68 = vmatprep.subr.mxu0 0.0
    %69 = vmatpush1.xpose.msra.mxu0 %v51
    %70 = vmatprep.subr.mxu0 0.0
    %71 = vmatpush1.xpose.msra.mxu0 %v52
    %72 = vmatprep.subr.mxu0 0.0
    %73 = vmatpush1.xpose.msra.mxu0 %v53
    %74 = vmatprep.subr.mxu0 0.0
    %75 = vmatpush1.xpose.msra.mxu0 %v54
    %76 = vmatprep.subr.mxu0 0.0
    %77 = vmatpush1.xpose.msra.mxu0 %v55
    %78 = vmatprep.subr.mxu0 0.0
    %79 = vmatpush1.xpose.msra.mxu0 %v56
    %80 = vmatprep.subr.mxu0 0.0
    %81 = vmatpush1.xpose.msra.mxu0 %v57
    %82 = vmatprep.subr.mxu0 0.0
    %83 = vmatpush1.xpose.msra.mxu0 %v58
    %84 = vmatprep.subr.mxu0 0.0
    %85 = vmatpush1.xpose.msra.mxu0 %v59
    %86 = vmatprep.subr.mxu0 0.0
    %87 = vmatpush1.xpose.msra.mxu0 %v60
    %88 = vmatprep.subr.mxu0 0.0
    %89 = vmatpush1.xpose.msra.mxu0 %v61
    %90 = vmatprep.subr.mxu0 0.0
    %91 = vmatpush1.xpose.msra.mxu0 %v62
    %92 = vmatprep.subr.mxu0 0.0
    %93 = vmatpush1.xpose.msra.mxu0 %v63
    %94 = vmatprep.subr.mxu0 0.0
    %95 = vmatpush1.xpose.msra.mxu0 %v64
    %96 = vmatprep.subr.mxu0 0.0
    %97 = vmatpush1.xpose.msra.mxu0 %v65
    %98 = vmatprep.subr.mxu0 0.0
    %99 = vmatpush1.xpose.msra.mxu0 0.0
    %100 = vmatprep.subr.mxu0 0.0
    %101 = vmatpush1.xpose.msra.mxu0 0.0
    %102 = vmatprep.subr.mxu0 0.0
    %103 = vmatpush1.xpose.msra.mxu0 0.0
    %104 = vmatprep.subr.mxu0 0.0
    %105 = vmatpush1.xpose.msra.mxu0 0.0
    %106 = vmatprep.subr.mxu0 0.0
    %107 = vmatpush1.xpose.msra.mxu0 0.0
    %108 = vmatprep.subr.mxu0 0.0
    %109 = vmatpush1.xpose.msra.mxu0 0.0
    %110 = vmatprep.subr.mxu0 0.0
    %111 = vmatpush1.xpose.msra.mxu0 0.0
    %112 = vmatprep.subr.mxu0 0.0
    %113 = vmatpush1.xpose.msra.mxu0 0.0
    %114 = vmatprep.subr.mxu0 0.0
    %115 = vmatpush1.xpose.msra.mxu0 0.0
    %116 = vmatprep.subr.mxu0 0.0
    %117 = vmatpush1.xpose.msra.mxu0 0.0
    %118 = vmatprep.subr.mxu0 0.0
    %119 = vmatpush1.xpose.msra.mxu0 0.0
    %120 = vmatprep.subr.mxu0 0.0
    %121 = vmatpush1.xpose.msra.mxu0 0.0
    %122 = vmatprep.subr.mxu0 0.0
    %123 = vmatpush1.xpose.msra.mxu0 0.0
    %124 = vmatprep.subr.mxu0 0.0
    %125 = vmatpush1.xpose.msra.mxu0 0.0
    %126 = vmatprep.subr.mxu0 0.0
    %127 = vmatpush1.xpose.msra.mxu0 0.0
    %128 = vmatprep.subr.mxu0 0.0
    %129 = vmatpush1.xpose.msra.mxu0 0.0
    %130 = vmatprep.mubr.f32.mxu0 0.0
    %131 = vmatmul.mubr.f32.gmra.mrb[0].mxu0 %v48
    %v132 = vpop.f32.mrb[0].mxu0
    %v133 = vadd.f32 0.0, %v132
    %v134 = vpop.f32.mrb[0].mxu0
    %135 = vmatprep.mubr.f32.mxu0 0.0
    %136 = vmatmul.mubr.f32.gmra.mrb[0].mxu0 %v49
    %v137 = vpop.f32.mrb[0].mxu0
    %v138 = vadd.f32 0.0, %v137
    %v139 = vpop.f32.mrb[0].mxu0
    %140 = vdwg.mxu0
    %v141 = vadd.f32 %v46, %v133
    %v142 = vadd.f32 %v47, %v138
    %143 = vst [vmem:[#allocation7] sm:$0xff] %v141
    %144 = vst [vmem:[#allocation7 + $0x8] sm:$0xff] %v142
    // Predicated region
    $region22: #{tpu_custom_call.1} parent=1 // pred_check
      %p145 = pneg %p40
    $region23: #{tpu_custom_call.1} parent=1 // pred_check_branch
      %147 = sbr.rel (%p145) target = $region25
    $region24: #{tpu_custom_call.1} parent=1 // pred_region
      %v148 = vld [vmem:[#allocation7] sm:$0xff]
      %v149 = vld [vmem:[#allocation7 + $0x8] sm:$0xff]
      %v150 = vmax.f32 %v148, 0.0
      %v151 = vmax.f32 %v149, 0.0
      %152 = vst [vmem:[#allocation7] sm:$0xff] %v150
      %153 = vst [vmem:[#allocation7 + $0x8] sm:$0xff] %v151
    $region25: #{tpu_custom_call.1} parent=1 // pred_fallthru
      _
    // Predicated region
    $region26: #{tpu_custom_call.1} parent=1 // pred_check
      _
    $region27: #{tpu_custom_call.1} parent=1 // pred_check_branch
      %155 = sbr.rel (0) target = $region29
    $region28: #{tpu_custom_call.1} parent=1 // pred_region
      %s157 = ssub.s32 256, 256
      %158 = vsyncadd [#allocation4], %s157
      %s159 = sshll.u32 [#allocation7], 4
      %s160 = int_to_ptr.vmem [resolvable:$true] %s159
      %165 = dma.vmem_to_hbm [thread:$0]  %s160, 256, %s2, [#allocation4], 128, 128, 8
    $region29: #{tpu_custom_call.1} parent=1 // pred_fallthru
      _
    // Predicated region
    $region30: #{tpu_custom_call.1} parent=1 // pred_check
      _
    $region31: #{tpu_custom_call.1} parent=1 // pred_check_branch
      %167 = sbr.rel (0) target = $region33
    $region32: #{tpu_custom_call.1} parent=1 // pred_region
      %168 = dma.done [#allocation4], 256
    $region33: #{tpu_custom_call.1} parent=1 // pred_fallthru
      _
    %169 = vsyncpa [#allocation3], 1
    %170 = vsyncpa [#allocation6], 1
    %171 = vsyncpa [#allocation4], 1

</llo_original>
